<compile_context>
chip_gen: v6e
topology: v6e:2x2x1
jax: 0.10.0
libtpu: 0.0.40
codegen_flags: <defaults>
</compile_context>

<pallas_src>
import functools
import math

import numpy as np
import jax
import jax.numpy as jnp
from jax.experimental import pallas as pl
from jax.experimental.pallas import tpu as pltpu

SELU_ALPHA = 1.6732632423543772848170429916717
SELU_SCALE = 1.0507009873554804934193349852946

DPAD = 128  # lane-aligned hidden feature width (real widths are <= 32)


def _selu(x):
    # exp goes to the EUP; the "-1" and select are cheap VPU filler.
    return SELU_SCALE * jnp.where(x > 0, x, SELU_ALPHA * (jnp.exp(x) - 1.0))


def _round_up(x, m):
    return int(math.ceil(x / m) * m)


def _cdiv(a, b):
    return -(-a // b)


def _make_mlp_kernel(num_rest_layers):
    """Fused MLP kernel.  Ref order: x, w0, w_rest, b_stack, out.

      x       (tm, in_pad)       f32   only the real input lanes are streamed
      w0      (in_pad, DPAD)     f32   first layer (tiny K), VMEM-resident
      w_rest  (L-1, DPAD, DPAD)  bf16  hidden + output layers, VMEM-resident
      b_stack (L, 1, DPAD)       f32
      out     (tm, out_width)    f32   only the real output lanes are written

    SELU after every layer except the last (matches the nn.Sequential).
    """

    def kernel(x_ref, w0_ref, wr_ref, b_ref, out_ref):
        # Layer 0: K <= 8, cost is negligible; keep it in plain f32.
        h = jnp.dot(x_ref[...], w0_ref[...],
                    preferred_element_type=jnp.float32)
        h = _selu(h + b_ref[0])
        # Remaining layers: bf16 x bf16 MXU fast path, f32 accumulation.
        for l in range(num_rest_layers):                 # static unroll
            h = jnp.dot(h.astype(jnp.bfloat16), wr_ref[l],
                        preferred_element_type=jnp.float32)
            h = h + b_ref[l + 1]                         # (1, DPAD) broadcast
            if l < num_rest_layers - 1:
                h = _selu(h)
        # Masked (sub-128-lane) final store of just the real output columns.
        out_ref[...] = h[:, :out_ref.shape[-1]]

    return kernel


def init_p3d_emuv1_params(key, nhidden, nwidth1, nwidth2,
                          input_pars=6, output_pars=8):
    """Deterministic synthetic init mirroring the torch layer shapes.

    Weights are (in_features, out_features) so each layer is y = x @ W + b.
    """
    params = np.linspace(nwidth1, nwidth2, nhidden + 1, dtype=int)
    dims = [input_pars, int(params[0])]
    for k in range(nhidden):
        dims.append(int(params[k + 1]))
    dims.append(output_pars)

    weights, biases = [], []
    for i in range(len(dims) - 1):
        key, kw, kb = jax.random.split(key, 3)
        bound = 1.0 / np.sqrt(dims[i])
        w = jax.random.uniform(kw, (dims[i], dims[i + 1]), jnp.float32,
                               minval=-bound, maxval=bound)
        b = jax.random.uniform(kb, (dims[i + 1],), jnp.float32,
                               minval=-bound, maxval=bound)
        weights.append(w)
        biases.append(b)
    return weights, biases


def pack_p3d_params(weights, biases, dpad=DPAD):
    """One-time padding + stacking of all layer params (outside the per-call
    path).  Returns:
      w0      (in_pad, dpad)                 f32
      w_rest  (num_layers-1, dpad, dpad)     bf16
      b_stack (num_layers, 1, dpad)          f32
    Padded rows/cols are zero."""
    num_layers = len(weights)
    in_dim = int(weights[0].shape[0])
    in_pad = max(8, _round_up(in_dim, 8))

    w0 = np.zeros((in_pad, dpad), np.float32)
    w0[:in_dim, :weights[0].shape[1]] = np.asarray(weights[0], np.float32)

    w_rest = np.zeros((num_layers - 1, dpad, dpad), np.float32)
    for l in range(1, num_layers):
        w = np.asarray(weights[l], np.float32)
        w_rest[l - 1, :w.shape[0], :w.shape[1]] = w

    b_stack = np.zeros((num_layers, 1, dpad), np.float32)
    for l, b in enumerate(biases):
        b = np.asarray(b, np.float32)
        b_stack[l, 0, :b.shape[0]] = b

    return (jnp.asarray(w0, jnp.float32),
            jnp.asarray(w_rest, jnp.bfloat16),
            jnp.asarray(b_stack, jnp.float32))


@functools.partial(jax.jit, static_argnames=("output_pars", "tm"))
def p3d_emuv1_forward(x, w0, w_rest, b_stack, *, output_pars, tm=1024):
    """Runs the whole MLP in a single fused Pallas kernel."""
    num_rest = int(w_rest.shape[0])
    num_layers = num_rest + 1
    in_pad, dpad = w0.shape
    batch, in_dim = x.shape
    out_width = output_pars
    kernel = _make_mlp_kernel(num_rest)

    if batch <= tm:
        # Small-batch path: one kernel invocation, no grid, whole arrays in VMEM.
        bpad = max(8, _round_up(batch, 8))
        x_p = jnp.pad(x.astype(jnp.float32),
                      ((0, bpad - batch), (0, in_pad - in_dim)))
        out = pl.pallas_call(
            kernel,
            out_shape=jax.ShapeDtypeStruct((bpad, out_width), jnp.float32),
            in_specs=[pl.BlockSpec(memory_space=pltpu.MemorySpace.VMEM)] * 4,
            out_specs=pl.BlockSpec(memory_space=pltpu.MemorySpace.VMEM),
        )(x_p, w0, w_rest, b_stack)
    else:
        # Large-batch path: batch tiled on a "parallel" grid axis.  Weight /
        # bias block indices are constant so they stay VMEM-resident; only the
        # narrow (tm, 8)-ish activation/output tiles pipeline through HBM.
        # Cap tm so there are >= 2 tiles (v7x megacore), 256-row granularity
        # keeps batch-padding waste bounded.
        tm_eff = min(tm, max(256, _round_up(_cdiv(batch, 2), 256)))
        ntiles = _cdiv(batch, tm_eff)
        bpad = ntiles * tm_eff
        x_p = jnp.pad(x.astype(jnp.float32),
                      ((0, bpad - batch), (0, in_pad - in_dim)))
        out = pl.pallas_call(
            kernel,
            out_shape=jax.ShapeDtypeStruct((bpad, out_width), jnp.float32),
            grid=(ntiles,),
            in_specs=[
                pl.BlockSpec((tm_eff, in_pad), lambda i: (i, 0)),
                pl.BlockSpec((in_pad, dpad), lambda i: (0, 0)),
                pl.BlockSpec((num_rest, dpad, dpad), lambda i: (0, 0, 0)),
                pl.BlockSpec((num_layers, 1, dpad), lambda i: (0, 0, 0)),
            ],
            out_specs=pl.BlockSpec((tm_eff, out_width), lambda i: (i, 0)),
            compiler_params=pltpu.CompilerParams(
                dimension_semantics=("parallel",)),
        )(x_p, w0, w_rest, b_stack)

    return out[:batch]


def p3d_emuv1_reference(x, w0, w_rest, b_stack, output_pars):
    """Pure-JAX reference using the same packed params and the same bf16
    activation/weight rounding as the kernel (f32 accumulation)."""
    batch, in_dim = x.shape
    in_pad, dpad = w0.shape
    h = jnp.zeros((batch, in_pad), jnp.float32).at[:, :in_dim].set(
        x.astype(jnp.float32))
    h = jnp.dot(h, w0, preferred_element_type=jnp.float32) + b_stack[0]
    h = _selu(h)
    num_rest = w_rest.shape[0]
    for l in range(num_rest):
        h = jnp.dot(h.astype(jnp.bfloat16), w_rest[l],
                    preferred_element_type=jnp.float32) + b_stack[l + 1]
        if l < num_rest - 1:
            h = _selu(h)
    return h[:, :output_pars]


if __name__ == "__main__":
    # Config consistent with the module: P3D_emuv1(nhidden=2, nwidth1=32,
    # nwidth2=16, input_pars=6, output_pars=8); batch of 8 parameter vectors.
    nhidden, nwidth1, nwidth2 = 2, 32, 16
    input_pars, output_pars = 6, 8
    batch = 8

    key = jax.random.PRNGKey(0)
    key, kx = jax.random.split(key)
    x = jax.random.normal(kx, (batch, input_pars), jnp.float32)

    weights, biases = init_p3d_emuv1_params(
        key, nhidden, nwidth1, nwidth2, input_pars, output_pars)
    # One-time packing (pad + stack + bf16 cast) -- outside the jitted forward.
    w0, w_rest, b_stack = pack_p3d_params(weights, biases)

    # Small-batch (gridless) path.
    coeffs_arinyo = p3d_emuv1_forward(x, w0, w_rest, b_stack,
                                      output_pars=output_pars)
    jax.block_until_ready(coeffs_arinyo)
    assert coeffs_arinyo.shape == (batch, output_pars)
    ref = p3d_emuv1_reference(x, w0, w_rest, b_stack, output_pars)
    np.testing.assert_allclose(np.asarray(coeffs_arinyo), np.asarray(ref),
                               rtol=1e-3, atol=1e-3)

    # Exercise the batch-tiled "parallel" grid path (>= 2 tiles) as well.
    x_big = jax.random.normal(jax.random.PRNGKey(1), (3000, input_pars),
                              jnp.float32)
    out_big = p3d_emuv1_forward(x_big, w0, w_rest, b_stack,
                                output_pars=output_pars)
    jax.block_until_ready(out_big)
    ref_big = p3d_emuv1_reference(x_big, w0, w_rest, b_stack, output_pars)
    np.testing.assert_allclose(np.asarray(out_big), np.asarray(ref_big),
                               rtol=1e-3, atol=1e-3)

    print("KERNEL_OK")
</pallas_src>

<mosaic_0001>
module attributes {stable_mosaic.version = 11 : i64} {
  func.func @kernel(%arg0: memref<8x8xf32, #tpu.memory_space<vmem>>, %arg1: memref<8x128xf32, #tpu.memory_space<vmem>>, %arg2: memref<3x128x128xbf16, #tpu.memory_space<vmem>>, %arg3: memref<4x1x128xf32, #tpu.memory_space<vmem>>, %arg4: memref<8x8xf32, #tpu.memory_space<vmem>>) attributes {dimension_semantics = [], scalar_prefetch = 0 : i64, scratch_operands = 0 : i64, tpu.core_type = #tpu.core_type<tc>} {
    %c0 = arith.constant 0 : index
    %c0_0 = arith.constant 0 : index
    %0 = vector.load %arg0[%c0, %c0_0] : memref<8x8xf32, #tpu.memory_space<vmem>>, vector<8x8xf32>
    %c0_1 = arith.constant 0 : index
    %c0_2 = arith.constant 0 : index
    %1 = vector.load %arg1[%c0_1, %c0_2] : memref<8x128xf32, #tpu.memory_space<vmem>>, vector<8x128xf32>
    %cst = arith.constant dense<0.000000e+00> : vector<8x128xf32>
    %2 = tpu.matmul %0, %1, %cst {dimension_numbers = #tpu.dot_dimension_numbers<[1], [0], [0], [1], [0, 0, 1, 1], [], []>} : vector<8x8xf32>, vector<8x128xf32>, vector<8x128xf32> -> vector<8x128xf32>
    %c0_3 = arith.constant 0 : index
    %c0_4 = arith.constant 0 : index
    %c0_5 = arith.constant 0 : index
    %3 = vector.load %arg3[%c0_3, %c0_4, %c0_5] : memref<4x1x128xf32, #tpu.memory_space<vmem>>, vector<1x1x128xf32>
    %4 = vector.shape_cast %3 : vector<1x1x128xf32> to vector<1x128xf32>
    %5 = vector.broadcast %4 : vector<1x128xf32> to vector<8x128xf32>
    %6 = arith.addf %2, %5 : vector<8x128xf32>
    %cst_6 = arith.constant 0.000000e+00 : f32
    %7 = vector.broadcast %cst_6 : f32 to vector<8x128xf32>
    %8 = arith.cmpf ogt, %6, %7 : vector<8x128xf32>
    %9 = math.exp %6 : vector<8x128xf32>
    %cst_7 = arith.constant 1.000000e+00 : f32
    %10 = vector.broadcast %cst_7 : f32 to vector<8x128xf32>
    %11 = arith.subf %9, %10 : vector<8x128xf32>
    %cst_8 = arith.constant 1.67326319 : f32
    %12 = vector.broadcast %cst_8 : f32 to vector<8x128xf32>
    %13 = arith.mulf %12, %11 : vector<8x128xf32>
    %14 = arith.select %8, %6, %13 : vector<8x128xi1>, vector<8x128xf32>
    %cst_9 = arith.constant 1.05070102 : f32
    %15 = vector.broadcast %cst_9 : f32 to vector<8x128xf32>
    %16 = arith.mulf %15, %14 : vector<8x128xf32>
    %17 = arith.truncf %16 : vector<8x128xf32> to vector<8x128xbf16>
    %c0_10 = arith.constant 0 : index
    %c0_11 = arith.constant 0 : index
    %c0_12 = arith.constant 0 : index
    %18 = vector.load %arg2[%c0_10, %c0_11, %c0_12] : memref<3x128x128xbf16, #tpu.memory_space<vmem>>, vector<1x128x128xbf16>
    %19 = vector.shape_cast %18 : vector<1x128x128xbf16> to vector<128x128xbf16>
    %cst_13 = arith.constant dense<0.000000e+00> : vector<8x128xf32>
    %20 = tpu.matmul %17, %19, %cst_13 {dimension_numbers = #tpu.dot_dimension_numbers<[1], [0], [0], [1], [0, 0, 1, 1], [], []>} : vector<8x128xbf16>, vector<128x128xbf16>, vector<8x128xf32> -> vector<8x128xf32>
    %c1 = arith.constant 1 : index
    %c0_14 = arith.constant 0 : index
    %c0_15 = arith.constant 0 : index
    %21 = vector.load %arg3[%c1, %c0_14, %c0_15] : memref<4x1x128xf32, #tpu.memory_space<vmem>>, vector<1x1x128xf32>
    %22 = vector.shape_cast %21 : vector<1x1x128xf32> to vector<1x128xf32>
    %23 = vector.broadcast %22 : vector<1x128xf32> to vector<8x128xf32>
    %24 = arith.addf %20, %23 : vector<8x128xf32>
    %cst_16 = arith.constant 0.000000e+00 : f32
    %25 = vector.broadcast %cst_16 : f32 to vector<8x128xf32>
    %26 = arith.cmpf ogt, %24, %25 : vector<8x128xf32>
    %27 = math.exp %24 : vector<8x128xf32>
    %cst_17 = arith.constant 1.000000e+00 : f32
    %28 = vector.broadcast %cst_17 : f32 to vector<8x128xf32>
    %29 = arith.subf %27, %28 : vector<8x128xf32>
    %cst_18 = arith.constant 1.67326319 : f32
    %30 = vector.broadcast %cst_18 : f32 to vector<8x128xf32>
    %31 = arith.mulf %30, %29 : vector<8x128xf32>
    %32 = arith.select %26, %24, %31 : vector<8x128xi1>, vector<8x128xf32>
    %cst_19 = arith.constant 1.05070102 : f32
    %33 = vector.broadcast %cst_19 : f32 to vector<8x128xf32>
    %34 = arith.mulf %33, %32 : vector<8x128xf32>
    %35 = arith.truncf %34 : vector<8x128xf32> to vector<8x128xbf16>
    %c1_20 = arith.constant 1 : index
    %c0_21 = arith.constant 0 : index
    %c0_22 = arith.constant 0 : index
    %36 = vector.load %arg2[%c1_20, %c0_21, %c0_22] : memref<3x128x128xbf16, #tpu.memory_space<vmem>>, vector<1x128x128xbf16>
    %37 = vector.shape_cast %36 : vector<1x128x128xbf16> to vector<128x128xbf16>
    %cst_23 = arith.constant dense<0.000000e+00> : vector<8x128xf32>
    %38 = tpu.matmul %35, %37, %cst_23 {dimension_numbers = #tpu.dot_dimension_numbers<[1], [0], [0], [1], [0, 0, 1, 1], [], []>} : vector<8x128xbf16>, vector<128x128xbf16>, vector<8x128xf32> -> vector<8x128xf32>
    %c2 = arith.constant 2 : index
    %c0_24 = arith.constant 0 : index
    %c0_25 = arith.constant 0 : index
    %39 = vector.load %arg3[%c2, %c0_24, %c0_25] : memref<4x1x128xf32, #tpu.memory_space<vmem>>, vector<1x1x128xf32>
    %40 = vector.shape_cast %39 : vector<1x1x128xf32> to vector<1x128xf32>
    %41 = vector.broadcast %40 : vector<1x128xf32> to vector<8x128xf32>
    %42 = arith.addf %38, %41 : vector<8x128xf32>
    %cst_26 = arith.constant 0.000000e+00 : f32
    %43 = vector.broadcast %cst_26 : f32 to vector<8x128xf32>
    %44 = arith.cmpf ogt, %42, %43 : vector<8x128xf32>
    %45 = math.exp %42 : vector<8x128xf32>
    %cst_27 = arith.constant 1.000000e+00 : f32
    %46 = vector.broadcast %cst_27 : f32 to vector<8x128xf32>
    %47 = arith.subf %45, %46 : vector<8x128xf32>
    %cst_28 = arith.constant 1.67326319 : f32
    %48 = vector.broadcast %cst_28 : f32 to vector<8x128xf32>
    %49 = arith.mulf %48, %47 : vector<8x128xf32>
    %50 = arith.select %44, %42, %49 : vector<8x128xi1>, vector<8x128xf32>
    %cst_29 = arith.constant 1.05070102 : f32
    %51 = vector.broadcast %cst_29 : f32 to vector<8x128xf32>
    %52 = arith.mulf %51, %50 : vector<8x128xf32>
    %53 = arith.truncf %52 : vector<8x128xf32> to vector<8x128xbf16>
    %c2_30 = arith.constant 2 : index
    %c0_31 = arith.constant 0 : index
    %c0_32 = arith.constant 0 : index
    %54 = vector.load %arg2[%c2_30, %c0_31, %c0_32] : memref<3x128x128xbf16, #tpu.memory_space<vmem>>, vector<1x128x128xbf16>
    %55 = vector.shape_cast %54 : vector<1x128x128xbf16> to vector<128x128xbf16>
    %cst_33 = arith.constant dense<0.000000e+00> : vector<8x128xf32>
    %56 = tpu.matmul %53, %55, %cst_33 {dimension_numbers = #tpu.dot_dimension_numbers<[1], [0], [0], [1], [0, 0, 1, 1], [], []>} : vector<8x128xbf16>, vector<128x128xbf16>, vector<8x128xf32> -> vector<8x128xf32>
    %c3 = arith.constant 3 : index
    %c0_34 = arith.constant 0 : index
    %c0_35 = arith.constant 0 : index
    %57 = vector.load %arg3[%c3, %c0_34, %c0_35] : memref<4x1x128xf32, #tpu.memory_space<vmem>>, vector<1x1x128xf32>
    %58 = vector.shape_cast %57 : vector<1x1x128xf32> to vector<1x128xf32>
    %59 = vector.broadcast %58 : vector<1x128xf32> to vector<8x128xf32>
    %60 = arith.addf %56, %59 : vector<8x128xf32>
    %61 = vector.extract_strided_slice %60 {offsets = [0, 0], sizes = [8, 8], strides = [1, 1]} : vector<8x128xf32> to vector<8x8xf32>
    %c0_36 = arith.constant 0 : index
    %c0_37 = arith.constant 0 : index
    %62 = vector.load %arg4[%c0_36, %c0_37] : memref<8x8xf32, #tpu.memory_space<vmem>>, vector<8x8xf32>
    tpu.vector_store %arg4[%c0_36, %c0_37], %61 {strides = array<i32>} : memref<8x8xf32, #tpu.memory_space<vmem>>, vector<8x8xf32>,
    return
  }
}

</mosaic_0001>

<llo_original>
// kernel: p3d_emuv1_forward.1
$region0: #{p3d_emuv1_forward.1}
  #allocation0 [shape = 'u32[]', space=smem, size = 0x4, offset = 0x4, fixed_abs, tag = 'smem constant byte address 0x4 - core index']
  #allocation1 [shape = 'u32[144,128]{1,0:T(1,128)}', space=vmem, size = 0x12000, scoped, tag = 'internal scratch']
  %s0 = inlined_call_operand.vmem [shape: f32[8,8], index: 0, kind: input, shape index: {}]
  %s1 = inlined_call_operand.vmem [shape: f32[8,128], index: 1, kind: input, shape index: {}]
  %s2 = inlined_call_operand.hbm [shape: bf16[3,128,128], index: 2, kind: input, shape index: {}]
  %s3 = inlined_call_operand.vmem [shape: f32[4,1,128], index: 3, kind: input, shape index: {}]
  %s4 = inlined_call_operand.hbm [shape: f32[8,8], index: 4, kind: output, shape index: {}]
  %s5 = sld [smem:[#allocation0]]
  $region30: #{p3d_emuv1_forward.1} parent=0
    _
  %s7 = ssub.s32 1, %s5
  %s8 = scalar_select 0, %s7, %s5
  $region1: #{p3d_emuv1_forward.1} parent=0
    #allocation2 [shape = 'u8[98304]{0}', space=vmem, size = 0x18000, scoped, tag = 'input window, operand 2, single buffered']
    #allocation3 [shape = 's32[1]{0}', space=sflag, size = 0x4, scoped, tag = 'scoped memory for p3d_emuv1_forward.1']
    #allocation4 [shape = 's32[1]{0}', space=sflag, size = 0x4, scoped, tag = 'scoped memory for p3d_emuv1_forward.1']
    #allocation5 [shape = 'u8[4096]{0}', space=vmem, size = 0x1000, scoped, tag = 'output window, operand 0, single buffered']
    %9 = vsyncpa [#allocation3], 0
    %10 = vsyncpa [#allocation4], 0
    // Predicated region
    $region2: #{p3d_emuv1_forward.1} parent=1 // pred_check
      _
    $region3: #{p3d_emuv1_forward.1} parent=1 // pred_check_branch
      %12 = sbr.rel (0) target = $region5
    $region4: #{p3d_emuv1_forward.1} parent=1 // pred_region
      _
    $region5: #{p3d_emuv1_forward.1} parent=1 // pred_fallthru
      _
    // Predicated region
    $region6: #{p3d_emuv1_forward.1} parent=1 // pred_check
      _
    $region7: #{p3d_emuv1_forward.1} parent=1 // pred_check_branch
      %14 = sbr.rel (0) target = $region9
    $region8: #{p3d_emuv1_forward.1} parent=1 // pred_region
      _
    $region9: #{p3d_emuv1_forward.1} parent=1 // pred_fallthru
      _
    // Predicated region
    $region10: #{p3d_emuv1_forward.1} parent=1 // pred_check
      _
    $region11: #{p3d_emuv1_forward.1} parent=1 // pred_check_branch
      %16 = sbr.rel (0) target = $region13
    $region12: #{p3d_emuv1_forward.1} parent=1 // pred_region
      %s18 = ssub.s32 3072, 3072
      %19 = vsyncadd [#allocation3], %s18
      %s20 = sshll.u32 [#allocation2], 4
      %s21 = int_to_ptr.vmem [resolvable:$true] %s20
      %26 = dma.hbm_to_vmem [thread:$0]  %s2, 3072, %s21, [#allocation3], 64, 64, 4
    $region13: #{p3d_emuv1_forward.1} parent=1 // pred_fallthru
      _
    // Predicated region
    $region14: #{p3d_emuv1_forward.1} parent=1 // pred_check
      _
    $region15: #{p3d_emuv1_forward.1} parent=1 // pred_check_branch
      %28 = sbr.rel (0) target = $region17
    $region16: #{p3d_emuv1_forward.1} parent=1 // pred_region
      _
    $region17: #{p3d_emuv1_forward.1} parent=1 // pred_fallthru
      _
    // Predicated region
    $region18: #{p3d_emuv1_forward.1} parent=1 // pred_check
      _
    $region19: #{p3d_emuv1_forward.1} parent=1 // pred_check_branch
      %30 = sbr.rel (0) target = $region21
    $region20: #{p3d_emuv1_forward.1} parent=1 // pred_region
      %31 = dma.done [#allocation3], 3072
    $region21: #{p3d_emuv1_forward.1} parent=1 // pred_fallthru
      _
    %v33 = vld [vmem:[%s0] sm:$0xff]
    %v34 = vld [vmem:[%s1] sm:$0xff]
    %v35 = vld [vmem:[%s3] sm:$0x1]
    %v37 = vlaneseq
    %v38 = vshrl.u32 %v37, 7
    %v39 = vsub.s32 0, %v38
    %v40 = vrot.slane %v35, %v39
    %vm42 = vcmask 64512
    %v44 = vsel %vm42, %v33, 0
    %46 = vmatprep.subr.mxu0 0.0
    %47 = vmatpush1.msra.mxu0 0.0
    %48 = vmatprep.subr.mxu0 0.0
    %49 = vmatpush1.msra.mxu0 0.0
    %50 = vmatprep.subr.mxu0 0.0
    %51 = vmatpush1.msra.mxu0 0.0
    %52 = vmatprep.subr.mxu0 0.0
    %53 = vmatpush1.msra.mxu0 0.0
    %54 = vmatprep.subr.mxu0 0.0
    %55 = vmatpush1.msra.mxu0 0.0
    %56 = vmatprep.subr.mxu0 0.0
    %57 = vmatpush1.msra.mxu0 0.0
    %58 = vmatprep.subr.mxu0 0.0
    %59 = vmatpush1.msra.mxu0 0.0
    %60 = vmatprep.subr.mxu0 0.0
    %61 = vmatpush1.msra.mxu0 0.0
    %62 = vmatprep.subr.mxu0 0.0
    %63 = vmatpush1.msra.mxu0 0.0
    %64 = vmatprep.subr.mxu0 0.0
    %65 = vmatpush1.msra.mxu0 0.0
    %66 = vmatprep.subr.mxu0 0.0
    %67 = vmatpush1.msra.mxu0 0.0
    %68 = vmatprep.subr.mxu0 0.0
    %69 = vmatpush1.msra.mxu0 0.0
    %70 = vmatprep.subr.mxu0 0.0
    %71 = vmatpush1.msra.mxu0 0.0
    %72 = vmatprep.subr.mxu0 0.0
    %73 = vmatpush1.msra.mxu0 0.0
    %74 = vmatprep.subr.mxu0 0.0
    %75 = vmatpush1.msra.mxu0 0.0
    %76 = vmatprep.subr.mxu0 0.0
    %77 = vmatpush1.msra.mxu0 %v34
    %78 = vmatprep.subr.mxu0 0.0
    %79 = vmatpush2.msra.mxu0 0.0
    %80 = vmatprep.subr.mxu0 0.0
    %81 = vmatpush2.msra.mxu0 0.0
    %82 = vmatprep.subr.mxu0 0.0
    %83 = vmatpush2.msra.mxu0 0.0
    %84 = vmatprep.subr.mxu0 0.0
    %85 = vmatpush2.msra.mxu0 0.0
    %86 = vmatprep.subr.mxu0 0.0
    %87 = vmatpush2.msra.mxu0 0.0
    %88 = vmatprep.subr.mxu0 0.0
    %89 = vmatpush2.msra.mxu0 0.0
    %90 = vmatprep.subr.mxu0 0.0
    %91 = vmatpush2.msra.mxu0 0.0
    %92 = vmatprep.subr.mxu0 0.0
    %93 = vmatpush2.msra.mxu0 0.0
    %94 = vmatprep.subr.mxu0 0.0
    %95 = vmatpush2.msra.mxu0 0.0
    %96 = vmatprep.subr.mxu0 0.0
    %97 = vmatpush2.msra.mxu0 0.0
    %98 = vmatprep.subr.mxu0 0.0
    %99 = vmatpush2.msra.mxu0 0.0
    %100 = vmatprep.subr.mxu0 0.0
    %101 = vmatpush2.msra.mxu0 0.0
    %102 = vmatprep.subr.mxu0 0.0
    %103 = vmatpush2.msra.mxu0 0.0
    %104 = vmatprep.subr.mxu0 0.0
    %105 = vmatpush2.msra.mxu0 0.0
    %106 = vmatprep.subr.mxu0 0.0
    %107 = vmatpush2.msra.mxu0 0.0
    %108 = vmatprep.subr.mxu0 0.0
    %109 = vmatpush2.msra.mxu0 0.0
    %110 = vmatprep.mubr.f32.mxu0 0.0
    %111 = vmatmul.mubr.f32.gmra.mxu0 %v44
    %v112 = vpop.f32.mrf.mxu0
    %v113 = vadd.f32 %v40, %v112
    %v114 = vpop.f32.mrf.mxu0
    %115 = vdwg.mxu0
    %vm116 = vcmp.gt.f32.partialorder %v113, 0.0
    %v117 = vmul.f32 %v113, 1.442695
    %v118 = vpow.pop %v117
    %v119 = vsub.f32 %v118, 1.0
    %v120 = vmul.f32 %v119, 1.6732632
    %v121 = vsel %vm116, %v113, %v120
    %v122 = vmul.f32 %v121, 1.050701
    %v123 = vpack.c.bf16 %v122, %v122
    %v124 = vld [vmem:[#allocation2] sm:$0xf]
    %v125 = vld [vmem:[#allocation2 + $0x4] sm:$0xf]
    %v126 = vld [vmem:[#allocation2 + $0x8] sm:$0xf]
    %v127 = vld [vmem:[#allocation2 + $0xc] sm:$0xf]
    %v128 = vld [vmem:[#allocation2 + $0x10] sm:$0xf]
    %v129 = vld [vmem:[#allocation2 + $0x14] sm:$0xf]
    %v130 = vld [vmem:[#allocation2 + $0x18] sm:$0xf]
    %v131 = vld [vmem:[#allocation2 + $0x1c] sm:$0xf]
    %v132 = vld [vmem:[#allocation2 + $0x20] sm:$0xf]
    %v133 = vld [vmem:[#allocation2 + $0x24] sm:$0xf]
    %v134 = vld [vmem:[#allocation2 + $0x28] sm:$0xf]
    %v135 = vld [vmem:[#allocation2 + $0x2c] sm:$0xf]
    %v136 = vld [vmem:[#allocation2 + $0x30] sm:$0xf]
    %v137 = vld [vmem:[#allocation2 + $0x34] sm:$0xf]
    %v138 = vld [vmem:[#allocation2 + $0x38] sm:$0xf]
    %v139 = vld [vmem:[#allocation2 + $0x3c] sm:$0xf]
    %s140 = scalar_lea.vmem %s3, 1
    %v141 = vld [vmem:[%s140] sm:$0x1]
    %v143 = vlaneseq
    %v144 = vshrl.u32 %v143, 7
    %v145 = vsub.s32 0, %v144
    %v146 = vrot.slane %v141, %v145
    %v164 = vunpack.c.l.b16 %v124
    %v165 = vunpack.c.l.b16 %v125
    %v166 = vunpack.c.l.b16 %v126
    %v167 = vunpack.c.l.b16 %v127
    %v168 = vunpack.c.l.b16 %v128
    %v169 = vunpack.c.l.b16 %v129
    %v170 = vunpack.c.l.b16 %v130
    %v171 = vunpack.c.l.b16 %v131
    %v172 = vunpack.c.l.b16 %v132
    %v173 = vunpack.c.l.b16 %v133
    %v174 = vunpack.c.l.b16 %v134
    %v175 = vunpack.c.l.b16 %v135
    %v176 = vunpack.c.l.b16 %v136
    %v177 = vunpack.c.l.b16 %v137
    %v178 = vunpack.c.l.b16 %v138
    %v179 = vunpack.c.l.b16 %v139
    %v180 = vpack.c.b16 %v165, %v164
    %v181 = vpack.c.b16 %v167, %v166
    %v182 = vpack.c.b16 %v169, %v168
    %v183 = vpack.c.b16 %v171, %v170
    %v184 = vpack.c.b16 %v173, %v172
    %v185 = vpack.c.b16 %v175, %v174
    %v186 = vpack.c.b16 %v177, %v176
    %v187 = vpack.c.b16 %v179, %v178
    %196 = vmatprep.subr.bf16.mxu0 0
    %197 = vmatpush1.bf16.msra.mxu0 %v187
    %198 = vmatprep.subr.bf16.mxu0 0
    %199 = vmatpush1.bf16.msra.mxu0 %v186
    %200 = vmatprep.subr.bf16.mxu0 0
    %201 = vmatpush1.bf16.msra.mxu0 %v185
    %202 = vmatprep.subr.bf16.mxu0 0
    %203 = vmatpush1.bf16.msra.mxu0 %v184
    %204 = vmatprep.subr.bf16.mxu0 0
    %205 = vmatpush1.bf16.msra.mxu0 %v183
    %206 = vmatprep.subr.bf16.mxu0 0
    %207 = vmatpush1.bf16.msra.mxu0 %v182
    %208 = vmatprep.subr.bf16.mxu0 0
    %209 = vmatpush1.bf16.msra.mxu0 %v181
    %210 = vmatprep.subr.bf16.mxu0 0
    %211 = vmatpush1.bf16.msra.mxu0 %v180
    %212 = vmatprep.subr.bf16.mxu0 0
    %213 = vmatpush2.bf16.msra.mxu0 0
    %214 = vmatprep.subr.bf16.mxu0 0
    %215 = vmatpush2.bf16.msra.mxu0 0
    %216 = vmatprep.subr.bf16.mxu0 0
    %217 = vmatpush2.bf16.msra.mxu0 0
    %218 = vmatprep.subr.bf16.mxu0 0
    %219 = vmatpush2.bf16.msra.mxu0 0
    %220 = vmatprep.subr.bf16.mxu0 0
    %221 = vmatpush2.bf16.msra.mxu0 0
    %222 = vmatprep.subr.bf16.mxu0 0
    %223 = vmatpush2.bf16.msra.mxu0 0
    %224 = vmatprep.subr.bf16.mxu0 0
    %225 = vmatpush2.bf16.msra.mxu0 0
    %226 = vmatprep.subr.bf16.mxu0 0
    %227 = vmatpush2.bf16.msra.mxu0 0
    %228 = vmatprep.mubr.bf16.mxu0 0
    %229 = vmatmul.mubr.bf16.gmra.mxu0 %v123
    %v230 = vpop.f32.mrf.mxu0
    %v231 = vadd.f32 %v146, %v230
    %v232 = vpop.f32.mrf.mxu0
    %v233 = vpop.f32.mrf.mxu0
    %v234 = vpop.f32.mrf.mxu0
    %235 = vdwg.mxu0
    %vm236 = vcmp.gt.f32.partialorder %v231, 0.0
    %v237 = vmul.f32 %v231, 1.442695
    %v238 = vpow.pop %v237
    %v239 = vsub.f32 %v238, 1.0
    %v240 = vmul.f32 %v239, 1.6732632
    %v241 = vsel %vm236, %v231, %v240
    %v242 = vmul.f32 %v241, 1.050701
    %v243 = vpack.c.bf16 %v242, %v242
    %s244 = scalar_lea.vmem [#allocation2], 64
    %v245 = vld [vmem:[%s244] sm:$0xf]
    %v246 = vld [vmem:[%s244 + $0x4] sm:$0xf]
    %v247 = vld [vmem:[%s244 + $0x8] sm:$0xf]
    %v248 = vld [vmem:[%s244 + $0xc] sm:$0xf]
    %v249 = vld [vmem:[%s244 + $0x10] sm:$0xf]
    %v250 = vld [vmem:[%s244 + $0x14] sm:$0xf]
    %v251 = vld [vmem:[%s244 + $0x18] sm:$0xf]
    %v252 = vld [vmem:[%s244 + $0x1c] sm:$0xf]
    %v253 = vld [vmem:[%s244 + $0x20] sm:$0xf]
    %v254 = vld [vmem:[%s244 + $0x24] sm:$0xf]
    %v255 = vld [vmem:[%s244 + $0x28] sm:$0xf]
    %v256 = vld [vmem:[%s244 + $0x2c] sm:$0xf]
    %v257 = vld [vmem:[%s244 + $0x30] sm:$0xf]
    %v258 = vld [vmem:[%s244 + $0x34] sm:$0xf]
    %v259 = vld [vmem:[%s244 + $0x38] sm:$0xf]
    %v260 = vld [vmem:[%s244 + $0x3c] sm:$0xf]
    %s261 = scalar_lea.vmem %s3, 2
    %v262 = vld [vmem:[%s261] sm:$0x1]
    %v264 = vlaneseq
    %v265 = vshrl.u32 %v264, 7
    %v266 = vsub.s32 0, %v265
    %v267 = vrot.slane %v262, %v266
    %v285 = vunpack.c.l.b16 %v245
    %v286 = vunpack.c.l.b16 %v246
    %v287 = vunpack.c.l.b16 %v247
    %v288 = vunpack.c.l.b16 %v248
    %v289 = vunpack.c.l.b16 %v249
    %v290 = vunpack.c.l.b16 %v250
    %v291 = vunpack.c.l.b16 %v251
    %v292 = vunpack.c.l.b16 %v252
    %v293 = vunpack.c.l.b16 %v253
    %v294 = vunpack.c.l.b16 %v254
    %v295 = vunpack.c.l.b16 %v255
    %v296 = vunpack.c.l.b16 %v256
    %v297 = vunpack.c.l.b16 %v257
    %v298 = vunpack.c.l.b16 %v258
    %v299 = vunpack.c.l.b16 %v259
    %v300 = vunpack.c.l.b16 %v260
    %v301 = vpack.c.b16 %v286, %v285
    %v302 = vpack.c.b16 %v288, %v287
    %v303 = vpack.c.b16 %v290, %v289
    %v304 = vpack.c.b16 %v292, %v291
    %v305 = vpack.c.b16 %v294, %v293
    %v306 = vpack.c.b16 %v296, %v295
    %v307 = vpack.c.b16 %v298, %v297
    %v308 = vpack.c.b16 %v300, %v299
    %317 = vmatprep.subr.bf16.mxu0 0
    %318 = vmatpush1.bf16.msra.mxu0 %v308
    %319 = vmatprep.subr.bf16.mxu0 0
    %320 = vmatpush1.bf16.msra.mxu0 %v307
    %321 = vmatprep.subr.bf16.mxu0 0
    %322 = vmatpush1.bf16.msra.mxu0 %v306
    %323 = vmatprep.subr.bf16.mxu0 0
    %324 = vmatpush1.bf16.msra.mxu0 %v305
    %325 = vmatprep.subr.bf16.mxu0 0
    %326 = vmatpush1.bf16.msra.mxu0 %v304
    %327 = vmatprep.subr.bf16.mxu0 0
    %328 = vmatpush1.bf16.msra.mxu0 %v303
    %329 = vmatprep.subr.bf16.mxu0 0
    %330 = vmatpush1.bf16.msra.mxu0 %v302
    %331 = vmatprep.subr.bf16.mxu0 0
    %332 = vmatpush1.bf16.msra.mxu0 %v301
    %333 = vmatprep.subr.bf16.mxu0 0
    %334 = vmatpush2.bf16.msra.mxu0 0
    %335 = vmatprep.subr.bf16.mxu0 0
    %336 = vmatpush2.bf16.msra.mxu0 0
    %337 = vmatprep.subr.bf16.mxu0 0
    %338 = vmatpush2.bf16.msra.mxu0 0
    %339 = vmatprep.subr.bf16.mxu0 0
    %340 = vmatpush2.bf16.msra.mxu0 0
    %341 = vmatprep.subr.bf16.mxu0 0
    %342 = vmatpush2.bf16.msra.mxu0 0
    %343 = vmatprep.subr.bf16.mxu0 0
    %344 = vmatpush2.bf16.msra.mxu0 0
    %345 = vmatprep.subr.bf16.mxu0 0
    %346 = vmatpush2.bf16.msra.mxu0 0
    %347 = vmatprep.subr.bf16.mxu0 0
    %348 = vmatpush2.bf16.msra.mxu0 0
    %349 = vmatprep.mubr.bf16.mxu0 0
    %350 = vmatmul.mubr.bf16.gmra.mxu0 %v243
    %v351 = vpop.f32.mrf.mxu0
    %v352 = vadd.f32 %v267, %v351
    %v353 = vpop.f32.mrf.mxu0
    %v354 = vpop.f32.mrf.mxu0
    %v355 = vpop.f32.mrf.mxu0
    %356 = vdwg.mxu0
    %vm357 = vcmp.gt.f32.partialorder %v352, 0.0
    %v358 = vmul.f32 %v352, 1.442695
    %v359 = vpow.pop %v358
    %v360 = vsub.f32 %v359, 1.0
    %v361 = vmul.f32 %v360, 1.6732632
    %v362 = vsel %vm357, %v352, %v361
    %v363 = vmul.f32 %v362, 1.050701
    %v364 = vpack.c.bf16 %v363, %v363
    %s365 = scalar_lea.vmem [#allocation2], 128
    %v366 = vld [vmem:[%s365] sm:$0xf]
    %v367 = vld [vmem:[%s365 + $0x4] sm:$0xf]
    %v368 = vld [vmem:[%s365 + $0x8] sm:$0xf]
    %v369 = vld [vmem:[%s365 + $0xc] sm:$0xf]
    %v370 = vld [vmem:[%s365 + $0x10] sm:$0xf]
    %v371 = vld [vmem:[%s365 + $0x14] sm:$0xf]
    %v372 = vld [vmem:[%s365 + $0x18] sm:$0xf]
    %v373 = vld [vmem:[%s365 + $0x1c] sm:$0xf]
    %v374 = vld [vmem:[%s365 + $0x20] sm:$0xf]
    %v375 = vld [vmem:[%s365 + $0x24] sm:$0xf]
    %v376 = vld [vmem:[%s365 + $0x28] sm:$0xf]
    %v377 = vld [vmem:[%s365 + $0x2c] sm:$0xf]
    %v378 = vld [vmem:[%s365 + $0x30] sm:$0xf]
    %v379 = vld [vmem:[%s365 + $0x34] sm:$0xf]
    %v380 = vld [vmem:[%s365 + $0x38] sm:$0xf]
    %v381 = vld [vmem:[%s365 + $0x3c] sm:$0xf]
    %s382 = scalar_lea.vmem %s3, 3
    %v383 = vld [vmem:[%s382] sm:$0x1]
    %v385 = vlaneseq
    %v386 = vshrl.u32 %v385, 7
    %v387 = vsub.s32 0, %v386
    %v388 = vrot.slane %v383, %v387
    %v406 = vunpack.c.l.b16 %v366
    %v407 = vunpack.c.l.b16 %v367
    %v408 = vunpack.c.l.b16 %v368
    %v409 = vunpack.c.l.b16 %v369
    %v410 = vunpack.c.l.b16 %v370
    %v411 = vunpack.c.l.b16 %v371
    %v412 = vunpack.c.l.b16 %v372
    %v413 = vunpack.c.l.b16 %v373
    %v414 = vunpack.c.l.b16 %v374
    %v415 = vunpack.c.l.b16 %v375
    %v416 = vunpack.c.l.b16 %v376
    %v417 = vunpack.c.l.b16 %v377
    %v418 = vunpack.c.l.b16 %v378
    %v419 = vunpack.c.l.b16 %v379
    %v420 = vunpack.c.l.b16 %v380
    %v421 = vunpack.c.l.b16 %v381
    %v422 = vpack.c.b16 %v407, %v406
    %v423 = vpack.c.b16 %v409, %v408
    %v424 = vpack.c.b16 %v411, %v410
    %v425 = vpack.c.b16 %v413, %v412
    %v426 = vpack.c.b16 %v415, %v414
    %v427 = vpack.c.b16 %v417, %v416
    %v428 = vpack.c.b16 %v419, %v418
    %v429 = vpack.c.b16 %v421, %v420
    %438 = vmatprep.subr.bf16.mxu0 0
    %439 = vmatpush1.bf16.msra.mxu0 %v429
    %440 = vmatprep.subr.bf16.mxu0 0
    %441 = vmatpush1.bf16.msra.mxu0 %v428
    %442 = vmatprep.subr.bf16.mxu0 0
    %443 = vmatpush1.bf16.msra.mxu0 %v427
    %444 = vmatprep.subr.bf16.mxu0 0
    %445 = vmatpush1.bf16.msra.mxu0 %v426
    %446 = vmatprep.subr.bf16.mxu0 0
    %447 = vmatpush1.bf16.msra.mxu0 %v425
    %448 = vmatprep.subr.bf16.mxu0 0
    %449 = vmatpush1.bf16.msra.mxu0 %v424
    %450 = vmatprep.subr.bf16.mxu0 0
    %451 = vmatpush1.bf16.msra.mxu0 %v423
    %452 = vmatprep.subr.bf16.mxu0 0
    %453 = vmatpush1.bf16.msra.mxu0 %v422
    %454 = vmatprep.subr.bf16.mxu0 0
    %455 = vmatpush2.bf16.msra.mxu0 0
    %456 = vmatprep.subr.bf16.mxu0 0
    %457 = vmatpush2.bf16.msra.mxu0 0
    %458 = vmatprep.subr.bf16.mxu0 0
    %459 = vmatpush2.bf16.msra.mxu0 0
    %460 = vmatprep.subr.bf16.mxu0 0
    %461 = vmatpush2.bf16.msra.mxu0 0
    %462 = vmatprep.subr.bf16.mxu0 0
    %463 = vmatpush2.bf16.msra.mxu0 0
    %464 = vmatprep.subr.bf16.mxu0 0
    %465 = vmatpush2.bf16.msra.mxu0 0
    %466 = vmatprep.subr.bf16.mxu0 0
    %467 = vmatpush2.bf16.msra.mxu0 0
    %468 = vmatprep.subr.bf16.mxu0 0
    %469 = vmatpush2.bf16.msra.mxu0 0
    %470 = vmatprep.mubr.bf16.mxu0 0
    %471 = vmatmul.mubr.bf16.gmra.mxu0 %v364
    %v472 = vpop.f32.mrf.mxu0
    %v473 = vadd.f32 %v388, %v472
    %v474 = vpop.f32.mrf.mxu0
    %v475 = vpop.f32.mrf.mxu0
    %v476 = vpop.f32.mrf.mxu0
    %477 = vdwg.mxu0
    %478 = vst.msk [vmem:[#allocation5] sm:$0xff] %vm42, %v473
    // Predicated region
    $region22: #{p3d_emuv1_forward.1} parent=1 // pred_check
      _
    $region23: #{p3d_emuv1_forward.1} parent=1 // pred_check_branch
      %480 = sbr.rel (0) target = $region25
    $region24: #{p3d_emuv1_forward.1} parent=1 // pred_region
      %s482 = ssub.s32 128, 128
      %483 = vsyncadd [#allocation4], %s482
      %s485 = sshll.u32 [#allocation5], 4
      %s486 = int_to_ptr.vmem [resolvable:$true] %s485
      %488 = dma.vmem_to_hbm [thread:$0]  %s486, 128, %s4, [#allocation4]
    $region25: #{p3d_emuv1_forward.1} parent=1 // pred_fallthru
      _
    // Predicated region
    $region26: #{p3d_emuv1_forward.1} parent=1 // pred_check
      _
    $region27: #{p3d_emuv1_forward.1} parent=1 // pred_check_branch
      %490 = sbr.rel (0) target = $region29
    $region28: #{p3d_emuv1_forward.1} parent=1 // pred_region
      %491 = dma.done [#allocation4], 128
    $region29: #{p3d_emuv1_forward.1} parent=1 // pred_fallthru
      _
    %492 = vsyncpa [#allocation3], 1
    %493 = vsyncpa [#allocation4], 1

</llo_original>
